<compile_context>
chip_gen: v6e
topology: v6e:2x2x1
jax: 0.10.0
libtpu: 0.0.40
codegen_flags: <defaults>
</compile_context>

<pallas_src>
import functools
import math

import jax
import jax.numpy as jnp
from jax.experimental import pallas as pl
from jax.experimental.pallas import tpu as pltpu


def _bin_index(x, edges_ref, n_bins, acc_dtype):
    """Bin index via monotone-edge counting.

    edges_ref rows 0..n_bins-2 hold the *inner* lower edges (bin_edges[:, 1:B]),
    row n_bins-1 holds the global upper edge (bin_edges[:, B]), all tiled along
    lanes to match the row fold.

    idx = sum_b 1[x >= inner_edge_b]   (monotone edges == first-True argmax)
    guarded by (x < upper_edge) so NaN / x >= upper / x below the first edge
    all map to 0, matching torch.argmax over an all-False mask.
    """
    cnt = jnp.zeros(x.shape, acc_dtype)
    for b in range(n_bins - 1):
        cnt = cnt + (x >= edges_ref[b, :]).astype(acc_dtype)
    return jnp.where(x < edges_ref[n_bins - 1, :], cnt, jnp.asarray(0, acc_dtype))


def _kbins_ordinal_kernel(x_ref, edges_ref, idx_ref, *, n_bins):
    idx_ref[...] = _bin_index(x_ref[...], edges_ref, n_bins, jnp.int32)


def _kbins_onehot_kernel(x_ref, edges_ref, r_ref, bins_ref, oh_ref, *, n_bins):
    # Bin index as f32 (values 0..B-1, finite, exactly representable).
    idx = _bin_index(x_ref[...], edges_ref, n_bins, jnp.float32)
    # Lane expansion (tile, kF) -> (tile, kF*B), feature-major, on the idle MXU.
    # r is block-diagonal 0/1 so every output picks exactly one idx value: exact
    # even in bf16 (B <= 256) with an f32 accumulator.
    idx_rep = jnp.dot(idx.astype(r_ref.dtype), r_ref[...],
                      preferred_element_type=jnp.float32)
    # bins_ref is the precomputed (1, kF*B) pattern [0..B-1, 0..B-1, ...].
    oh_ref[...] = (idx_rep == bins_ref[...]).astype(oh_ref.dtype)


def _largest_pow2_divisor(n):
    return (n & -n) if n > 0 else 1


def kbins_discretizer(x, bin_edges, *, encode="onehot-dense", tile_n=None,
                      vmem_budget_bytes=28 << 20, onehot_dtype=jnp.float32):
    """x: (N, F) float; bin_edges: (F, B+1) float, monotone per feature
    (hummingbird / sklearn guarantee).

    Returns:
      encode in ('onehot', 'onehot-dense'): (N, F*B) one-hot (feature-major,
        column f*B + b), dtype `onehot_dtype` (default float32, matching torch).
      otherwise ('ordinal'): (N, F) int32 bin indices.
        # TODO(synk): torch returns int64 from argmax; int32 used here (TPU-friendly).
    """
    x = jnp.asarray(x, jnp.float32)
    bin_edges = jnp.asarray(bin_edges, jnp.float32)
    N, F = x.shape
    B = bin_edges.shape[1] - 1
    onehot = encode in ("onehot", "onehot-dense")

    # ---------- lane-density row fold: (N, F) -> (N/k, k*F) ----------
    store_w = F * B if onehot else F
    k = 128 // math.gcd(store_w, 128)                 # lane-dense output store
    if onehot:
        k2 = 128 // math.gcd(k * F, 128)              # lane-dense compute too, if cheap
        if k * k2 * F <= 256:
            k *= k2
    kf_cap = 256 if onehot else 512                   # bounds MXU work / block width
    while k > 1 and k * F > kf_cap:
        k //= 2
    if onehot:
        r_itemsize = 2 if B <= 256 else 4
        while k > 1 and (k * F) * (k * store_w) * r_itemsize > (8 << 20):
            k //= 2                                   # cap expansion-matrix VMEM
    k = min(k, _largest_pow2_divisor(N))              # must divide N: no pad, no
    k = max(k, 1)                                     # output-slicing HBM pass

    Nf = N // k
    kF = k * F
    out_w = k * store_w

    xf = x.reshape(Nf, kF)                            # contiguous -> free reshape

    # Edges re-laid out for monotone counting, tiled k times along lanes.
    inner = bin_edges[:, 1:B].T                       # (B-1, F) inner lower edges
    upper = bin_edges[:, B][None, :]                  # (1, F)  global upper edge
    edges_rows = jnp.concatenate([inner, upper], axis=0)   # (B, F)
    edges_k = jnp.tile(edges_rows, (1, k))            # (B, kF)

    # ---------- tile sizing under an explicit VMEM budget ----------
    if onehot:
        r_dtype = jnp.bfloat16 if B <= 256 else jnp.float32
        out_isz = jnp.dtype(onehot_dtype).itemsize
        # x block (2 bufs + 1 temp) + out block (2 bufs) + ~3 f32 output-width temps.
        row_bytes = 4 * kF * 3 + out_w * (2 * out_isz + 3 * 4)
        fixed_bytes = 2 * (edges_k.size * 4
                           + kF * out_w * jnp.dtype(r_dtype).itemsize
                           + out_w * 4)
    else:
        row_bytes = 4 * kF * 6                        # x (x2), out (x2), temps (x2)
        fixed_bytes = 2 * edges_k.size * 4

    avail = max(vmem_budget_bytes - fixed_bytes, 1 << 20)
    tile_cap = max(8, (avail // row_bytes) // 8 * 8)

    if tile_n is not None:
        tile = max(1, int(tile_n) // k)               # tile_n given in original rows
    else:
        tile = tile_cap
        # Keep >= 4 pipeline steps when rows allow: prefetch/writeback overlap and
        # both v7x TensorCores get work via dimension_semantics=("parallel",).
        if Nf >= 4 * 8:
            tile = min(tile, pl.cdiv(Nf, 4))
    tile = min(tile, tile_cap)
    tile = max(8, (tile // 8) * 8)                    # sublane-aligned row tile
    if tile >= Nf:
        tile = Nf                                     # full-extent block (tiny inputs)
    grid = (pl.cdiv(Nf, tile),)                       # ragged tail = boundary block

    vmem_limit = int(fixed_bytes + tile * row_bytes + (8 << 20))
    cparams = pltpu.CompilerParams(dimension_semantics=("parallel",),
                                   vmem_limit_bytes=vmem_limit)

    if onehot:
        # Block-diagonal lane-expansion matrix for the fold:
        # r[j*F + f, (j*F + f)*B + b] = 1, so (idx @ r)[n, c] == idx[n, c // B].
        r = jnp.repeat(jnp.eye(kF, dtype=r_dtype), B, axis=1)            # (kF, out_w)
        bins = jnp.tile(jnp.arange(B, dtype=jnp.float32), kF)[None, :]   # (1, out_w)

        oh = pl.pallas_call(
            functools.partial(_kbins_onehot_kernel, n_bins=B),
            out_shape=jax.ShapeDtypeStruct((Nf, out_w), onehot_dtype),
            grid=grid,
            in_specs=[
                pl.BlockSpec((tile, kF), lambda i: (i, 0)),     # folded x rows
                pl.BlockSpec((B, kF), lambda i: (0, 0)),        # edges (grid-invariant)
                pl.BlockSpec((kF, out_w), lambda i: (0, 0)),    # expansion matrix
                pl.BlockSpec((1, out_w), lambda i: (0, 0)),     # bin-id pattern
            ],
            out_specs=pl.BlockSpec((tile, out_w), lambda i: (i, 0)),
            compiler_params=cparams,
        )(xf, edges_k, r, bins)
        return oh.reshape(N, F * B)                   # contiguous -> free reshape

    idx = pl.pallas_call(
        functools.partial(_kbins_ordinal_kernel, n_bins=B),
        out_shape=jax.ShapeDtypeStruct((Nf, kF), jnp.int32),
        grid=grid,
        in_specs=[
            pl.BlockSpec((tile, kF), lambda i: (i, 0)),
            pl.BlockSpec((B, kF), lambda i: (0, 0)),
        ],
        out_specs=pl.BlockSpec((tile, kF), lambda i: (i, 0)),
        compiler_params=cparams,
    )(xf, edges_k)
    return idx.reshape(N, F)


if __name__ == "__main__":
    key = jax.random.PRNGKey(0)
    N, F, B = 200, 16, 6

    x = jax.random.normal(key, (N, F), dtype=jnp.float32) * 2.0
    # Exercise the all-False -> bin 0 edge cases (torch argmax semantics).
    x = x.at[0, 0].set(jnp.nan)
    x = x.at[1, 1].set(jnp.inf)
    x = x.at[2, 2].set(-jnp.inf)

    # Synthetic monotone bin edges per feature, padded with -inf/+inf
    # (as hummingbird builds them for KBinsDiscretizer).
    inner = jnp.stack(
        [jnp.linspace(-2.0 + 0.1 * f, 2.0 + 0.1 * f, B - 1) for f in range(F)]
    ).astype(jnp.float32)                                           # (F, B-1)
    bin_edges = jnp.concatenate(
        [jnp.full((F, 1), -jnp.inf, jnp.float32),
         inner,
         jnp.full((F, 1), jnp.inf, jnp.float32)], axis=1)           # (F, B+1)
    # Put one value exactly on an inner edge to test the boundary tie-break.
    x = x.at[3, 3].set(bin_edges[3, 2])

    def reference(xv, edges):
        nb = edges.shape[1] - 1
        mask = (xv[:, :, None] >= edges[None, :, :-1]) & \
               (xv[:, :, None] < edges[None, :, 1:])                # (n, F, B)
        idx = jnp.argmax(mask.astype(jnp.float32), axis=2)          # (n, F)
        oh = jax.nn.one_hot(idx, nb, dtype=jnp.float32).reshape(xv.shape[0], -1)
        return idx, oh

    idx_ref, oh_ref = reference(x, bin_edges)

    # Auto tile: lane-folded (k=8 here), single wide block for this tiny N.
    out_oh = jax.block_until_ready(
        kbins_discretizer(x, bin_edges, encode="onehot-dense"))
    # Explicit small tile: multi-step grid with a ragged last (boundary) block.
    out_oh_tiled = jax.block_until_ready(
        kbins_discretizer(x, bin_edges, encode="onehot-dense", tile_n=64))
    out_ord = jax.block_until_ready(
        kbins_discretizer(x, bin_edges, encode="ordinal", tile_n=64))

    assert out_oh.shape == (N, F * B) and out_oh.dtype == jnp.float32
    assert out_ord.shape == (N, F) and out_ord.dtype == jnp.int32
    assert jnp.array_equal(out_oh, oh_ref)
    assert jnp.array_equal(out_oh_tiled, oh_ref)
    assert jnp.array_equal(out_ord, idx_ref.astype(jnp.int32))

    # Odd batch: no row fold possible (k=1) -> narrow-store fallback + ragged tail.
    x2 = x[:37]
    idx2_ref, oh2_ref = reference(x2, bin_edges)
    out_oh2 = jax.block_until_ready(
        kbins_discretizer(x2, bin_edges, encode="onehot-dense"))
    out_ord2 = jax.block_until_ready(
        kbins_discretizer(x2, bin_edges, encode="ordinal"))
    assert jnp.array_equal(out_oh2, oh2_ref)
    assert jnp.array_equal(out_ord2, idx2_ref.astype(jnp.int32))

    print("KERNEL_OK")
</pallas_src>

<mosaic_0001>
module attributes {stable_mosaic.version = 11 : i64} {
  func.func @_kbins_onehot_kernel(%arg0: i32, %arg1: memref<25x128xf32, #tpu.memory_space<vmem>>, %arg2: memref<6x128xf32, #tpu.memory_space<vmem>>, %arg3: memref<128x768xbf16, #tpu.memory_space<vmem>>, %arg4: memref<1x768xf32, #tpu.memory_space<vmem>>, %arg5: memref<25x768xf32, #tpu.memory_space<vmem>>) attributes {dimension_semantics = [#tpu.dimension_semantics<parallel>], iteration_bounds = array<i64: 1>, scalar_prefetch = 0 : i64, scratch_operands = 0 : i64, tpu.core_type = #tpu.core_type<tc>, window_params = [{transform_indices = @transform_0, window_bounds = array<i64: 25, 128>}, {pipeline_mode = #tpu.pipeline_mode<synchronous>, transform_indices = @transform_1, window_bounds = array<i64: 6, 128>}, {pipeline_mode = #tpu.pipeline_mode<synchronous>, transform_indices = @transform_2, window_bounds = array<i64: 128, 768>}, {pipeline_mode = #tpu.pipeline_mode<synchronous>, transform_indices = @transform_3, window_bounds = array<i64: 1, 768>}, {transform_indices = @transform_4, window_bounds = array<i64: 25, 768>}]} {
    %c0 = arith.constant 0 : index
    %c0_0 = arith.constant 0 : index
    %0 = vector.load %arg1[%c0, %c0_0] : memref<25x128xf32, #tpu.memory_space<vmem>>, vector<25x128xf32>
    %cst = arith.constant 0.000000e+00 : f32
    %1 = vector.broadcast %cst : f32 to vector<25x128xf32>
    %c0_1 = arith.constant 0 : index
    %c0_2 = arith.constant 0 : index
    %2 = vector.load %arg2[%c0_1, %c0_2] : memref<6x128xf32, #tpu.memory_space<vmem>>, vector<1x128xf32>
    %3 = vector.shape_cast %2 : vector<1x128xf32> to vector<128xf32>
    %4 = vector.shape_cast %3 : vector<128xf32> to vector<1x128xf32>
    %5 = vector.broadcast %4 : vector<1x128xf32> to vector<25x128xf32>
    %6 = arith.cmpf oge, %0, %5 : vector<25x128xf32>
    %7 = arith.extui %6 : vector<25x128xi1> to vector<25x128xi32>
    %8 = arith.sitofp %7 : vector<25x128xi32> to vector<25x128xf32>
    %9 = arith.addf %1, %8 : vector<25x128xf32>
    %c1 = arith.constant 1 : index
    %c0_3 = arith.constant 0 : index
    %10 = vector.load %arg2[%c1, %c0_3] : memref<6x128xf32, #tpu.memory_space<vmem>>, vector<1x128xf32>
    %11 = vector.shape_cast %10 : vector<1x128xf32> to vector<128xf32>
    %12 = vector.shape_cast %11 : vector<128xf32> to vector<1x128xf32>
    %13 = vector.broadcast %12 : vector<1x128xf32> to vector<25x128xf32>
    %14 = arith.cmpf oge, %0, %13 : vector<25x128xf32>
    %15 = arith.extui %14 : vector<25x128xi1> to vector<25x128xi32>
    %16 = arith.sitofp %15 : vector<25x128xi32> to vector<25x128xf32>
    %17 = arith.addf %9, %16 : vector<25x128xf32>
    %c2 = arith.constant 2 : index
    %c0_4 = arith.constant 0 : index
    %18 = vector.load %arg2[%c2, %c0_4] : memref<6x128xf32, #tpu.memory_space<vmem>>, vector<1x128xf32>
    %19 = vector.shape_cast %18 : vector<1x128xf32> to vector<128xf32>
    %20 = vector.shape_cast %19 : vector<128xf32> to vector<1x128xf32>
    %21 = vector.broadcast %20 : vector<1x128xf32> to vector<25x128xf32>
    %22 = arith.cmpf oge, %0, %21 : vector<25x128xf32>
    %23 = arith.extui %22 : vector<25x128xi1> to vector<25x128xi32>
    %24 = arith.sitofp %23 : vector<25x128xi32> to vector<25x128xf32>
    %25 = arith.addf %17, %24 : vector<25x128xf32>
    %c3 = arith.constant 3 : index
    %c0_5 = arith.constant 0 : index
    %26 = vector.load %arg2[%c3, %c0_5] : memref<6x128xf32, #tpu.memory_space<vmem>>, vector<1x128xf32>
    %27 = vector.shape_cast %26 : vector<1x128xf32> to vector<128xf32>
    %28 = vector.shape_cast %27 : vector<128xf32> to vector<1x128xf32>
    %29 = vector.broadcast %28 : vector<1x128xf32> to vector<25x128xf32>
    %30 = arith.cmpf oge, %0, %29 : vector<25x128xf32>
    %31 = arith.extui %30 : vector<25x128xi1> to vector<25x128xi32>
    %32 = arith.sitofp %31 : vector<25x128xi32> to vector<25x128xf32>
    %33 = arith.addf %25, %32 : vector<25x128xf32>
    %c4 = arith.constant 4 : index
    %c0_6 = arith.constant 0 : index
    %34 = vector.load %arg2[%c4, %c0_6] : memref<6x128xf32, #tpu.memory_space<vmem>>, vector<1x128xf32>
    %35 = vector.shape_cast %34 : vector<1x128xf32> to vector<128xf32>
    %36 = vector.shape_cast %35 : vector<128xf32> to vector<1x128xf32>
    %37 = vector.broadcast %36 : vector<1x128xf32> to vector<25x128xf32>
    %38 = arith.cmpf oge, %0, %37 : vector<25x128xf32>
    %39 = arith.extui %38 : vector<25x128xi1> to vector<25x128xi32>
    %40 = arith.sitofp %39 : vector<25x128xi32> to vector<25x128xf32>
    %41 = arith.addf %33, %40 : vector<25x128xf32>
    %c5 = arith.constant 5 : index
    %c0_7 = arith.constant 0 : index
    %42 = vector.load %arg2[%c5, %c0_7] : memref<6x128xf32, #tpu.memory_space<vmem>>, vector<1x128xf32>
    %43 = vector.shape_cast %42 : vector<1x128xf32> to vector<128xf32>
    %44 = vector.shape_cast %43 : vector<128xf32> to vector<1x128xf32>
    %45 = vector.broadcast %44 : vector<1x128xf32> to vector<25x128xf32>
    %46 = arith.cmpf olt, %0, %45 : vector<25x128xf32>
    %cst_8 = arith.constant 0.000000e+00 : f32
    %47 = vector.broadcast %cst_8 : f32 to vector<25x128xf32>
    %48 = arith.select %46, %41, %47 : vector<25x128xi1>, vector<25x128xf32>
    %49 = arith.truncf %48 : vector<25x128xf32> to vector<25x128xbf16>
    %c0_9 = arith.constant 0 : index
    %c0_10 = arith.constant 0 : index
    %50 = vector.load %arg3[%c0_9, %c0_10] : memref<128x768xbf16, #tpu.memory_space<vmem>>, vector<128x768xbf16>
    %cst_11 = arith.constant dense<0.000000e+00> : vector<25x768xf32>
    %51 = tpu.matmul %49, %50, %cst_11 {dimension_numbers = #tpu.dot_dimension_numbers<[1], [0], [0], [1], [0, 0, 1, 1], [], []>} : vector<25x128xbf16>, vector<128x768xbf16>, vector<25x768xf32> -> vector<25x768xf32>
    %c0_12 = arith.constant 0 : index
    %c0_13 = arith.constant 0 : index
    %52 = vector.load %arg4[%c0_12, %c0_13] : memref<1x768xf32, #tpu.memory_space<vmem>>, vector<1x768xf32>
    %53 = vector.broadcast %52 : vector<1x768xf32> to vector<25x768xf32>
    %54 = arith.cmpf oeq, %51, %53 : vector<25x768xf32>
    %55 = arith.extui %54 : vector<25x768xi1> to vector<25x768xi32>
    %56 = arith.sitofp %55 : vector<25x768xi32> to vector<25x768xf32>
    %c0_14 = arith.constant 0 : index
    %c0_15 = arith.constant 0 : index
    %57 = vector.load %arg5[%c0_14, %c0_15] : memref<25x768xf32, #tpu.memory_space<vmem>>, vector<25x768xf32>
    tpu.vector_store %arg5[%c0_14, %c0_15], %56 {strides = array<i32>} : memref<25x768xf32, #tpu.memory_space<vmem>>, vector<25x768xf32>,
    return
  }
  func.func @transform_0(%arg0: i32) -> (i32, i32) {
    %c0_i32 = arith.constant 0 : i32
    %c0_i32_0 = arith.constant 0 : i32
    return %arg0, %c0_i32 : i32, i32
  }
  func.func @transform_1(%arg0: i32) -> (i32, i32) {
    %c0_i32 = arith.constant 0 : i32
    %c0_i32_0 = arith.constant 0 : i32
    %c0_i32_1 = arith.constant 0 : i32
    return %c0_i32, %c0_i32_0 : i32, i32
  }
  func.func @transform_2(%arg0: i32) -> (i32, i32) {
    %c0_i32 = arith.constant 0 : i32
    %c0_i32_0 = arith.constant 0 : i32
    %c0_i32_1 = arith.constant 0 : i32
    return %c0_i32, %c0_i32_0 : i32, i32
  }
  func.func @transform_3(%arg0: i32) -> (i32, i32) {
    %c0_i32 = arith.constant 0 : i32
    %c0_i32_0 = arith.constant 0 : i32
    %c0_i32_1 = arith.constant 0 : i32
    return %c0_i32, %c0_i32_0 : i32, i32
  }
  func.func @transform_4(%arg0: i32) -> (i32, i32) {
    %c0_i32 = arith.constant 0 : i32
    %c0_i32_0 = arith.constant 0 : i32
    return %arg0, %c0_i32 : i32, i32
  }
}

</mosaic_0001>

<llo_original>
// kernel: tpu_custom_call.1
$region0: #{tpu_custom_call.1}
  #allocation0 [shape = 'u32[]', space=smem, size = 0x4, offset = 0x4, fixed_abs, tag = 'smem constant byte address 0x4 - core index']
  #allocation1 [shape = 'u32[144,128]{1,0:T(1,128)}', space=vmem, size = 0x12000, scoped, tag = 'internal scratch']
  %s0 = inlined_call_operand.hbm [shape: f32[25,128], index: 0, kind: input, shape index: {}]
  %s1 = inlined_call_operand.hbm [shape: f32[6,128], index: 1, kind: input, shape index: {}]
  %s2 = inlined_call_operand.hbm [shape: bf16[128,768], index: 2, kind: input, shape index: {}]
  %s3 = inlined_call_operand.hbm [shape: f32[1,768], index: 3, kind: input, shape index: {}]
  %s4 = inlined_call_operand.hbm [shape: f32[25,768], index: 4, kind: output, shape index: {}]
  %s5 = sld [smem:[#allocation0]]
  $region42: #{tpu_custom_call.1} parent=0
    _
  %s7 = ssub.s32 1, %s5
  %s8 = scalar_select 0, %s7, %s5
  $region1: #{tpu_custom_call.1} parent=0
    #allocation2 [shape = 'u8[16384]{0}', space=vmem, size = 0x4000, scoped, tag = 'input window, operand 0, single buffered']
    #allocation3 [shape = 's32[1]{0}', space=sflag, size = 0x4, scoped, tag = 'scoped memory for tpu_custom_call.1']
    #allocation4 [shape = 's32[1]{0}', space=sflag, size = 0x4, scoped, tag = 'scoped memory for tpu_custom_call.1']
    #allocation5 [shape = 'u8[4096]{0}', space=vmem, size = 0x1000, scoped, tag = 'input window, operand 1, single buffered']
    #allocation6 [shape = 's32[1]{0}', space=sflag, size = 0x4, scoped, tag = 'scoped memory for tpu_custom_call.1']
    #allocation7 [shape = 'u8[196608]{0}', space=vmem, size = 0x30000, scoped, tag = 'input window, operand 2, single buffered']
    #allocation8 [shape = 'u8[3072]{0}', space=vmem, size = 0xc00, scoped, tag = 'input window, operand 3, single buffered']
    #allocation9 [shape = 's32[1]{0}', space=sflag, size = 0x4, scoped, tag = 'scoped memory for tpu_custom_call.1']
    #allocation10 [shape = 'u8[98304]{0}', space=vmem, size = 0x18000, scoped, tag = 'output window, operand 0, single buffered']
    %9 = vsyncpa [#allocation3], 0
    %10 = vsyncpa [#allocation6], 0
    %11 = vsyncpa [#allocation9], 0
    %12 = vsyncpa [#allocation4], 0
    // Predicated region
    $region2: #{tpu_custom_call.1} parent=1 // pred_check
      _
    $region3: #{tpu_custom_call.1} parent=1 // pred_check_branch
      %14 = sbr.rel (0) target = $region5
    $region4: #{tpu_custom_call.1} parent=1 // pred_region
      %s16 = ssub.s32 512, 512
      %17 = vsyncadd [#allocation3], %s16
      %s18 = sshll.u32 [#allocation2], 4
      %s19 = int_to_ptr.vmem [resolvable:$true] %s18
      %24 = dma.hbm_to_vmem [thread:$0]  %s0, 512, %s19, [#allocation3], 128, 128, 8
    $region5: #{tpu_custom_call.1} parent=1 // pred_fallthru
      _
    // Predicated region
    $region6: #{tpu_custom_call.1} parent=1 // pred_check
      _
    $region7: #{tpu_custom_call.1} parent=1 // pred_check_branch
      %26 = sbr.rel (0) target = $region9
    $region8: #{tpu_custom_call.1} parent=1 // pred_region
      %s28 = ssub.s32 128, 128
      %29 = vsyncadd [#allocation6], %s28
      %s31 = sshll.u32 [#allocation5], 4
      %s32 = int_to_ptr.vmem [resolvable:$true] %s31
      %34 = dma.hbm_to_vmem [thread:$0]  %s1, 128, %s32, [#allocation6]
    $region9: #{tpu_custom_call.1} parent=1 // pred_fallthru
      _
    // Predicated region
    $region10: #{tpu_custom_call.1} parent=1 // pred_check
      _
    $region11: #{tpu_custom_call.1} parent=1 // pred_check_branch
      %36 = sbr.rel (0) target = $region13
    $region12: #{tpu_custom_call.1} parent=1 // pred_region
      %s38 = ssub.s32 6144, 6144
      %39 = vsyncadd [#allocation6], %s38
      %s40 = sshll.u32 [#allocation7], 4
      %s41 = int_to_ptr.vmem [resolvable:$true] %s40
      %46 = dma.hbm_to_vmem [thread:$0]  %s2, 6144, %s41, [#allocation6], 384, 384, 24
    $region13: #{tpu_custom_call.1} parent=1 // pred_fallthru
      _
    // Predicated region
    $region14: #{tpu_custom_call.1} parent=1 // pred_check
      _
    $region15: #{tpu_custom_call.1} parent=1 // pred_check_branch
      %48 = sbr.rel (0) target = $region17
    $region16: #{tpu_custom_call.1} parent=1 // pred_region
      %s50 = ssub.s32 96, 96
      %51 = vsyncadd [#allocation9], %s50
      %s53 = sshll.u32 [#allocation8], 4
      %s54 = int_to_ptr.vmem [resolvable:$true] %s53
      %56 = dma.hbm_to_vmem [thread:$0]  %s3, 96, %s54, [#allocation9]
    $region17: #{tpu_custom_call.1} parent=1 // pred_fallthru
      _
    // Predicated region
    $region18: #{tpu_custom_call.1} parent=1 // pred_check
      _
    $region19: #{tpu_custom_call.1} parent=1 // pred_check_branch
      %58 = sbr.rel (0) target = $region21
    $region20: #{tpu_custom_call.1} parent=1 // pred_region
      %59 = dma.done [#allocation3], 512
    $region21: #{tpu_custom_call.1} parent=1 // pred_fallthru
      _
    // Predicated region
    $region22: #{tpu_custom_call.1} parent=1 // pred_check
      _
    $region23: #{tpu_custom_call.1} parent=1 // pred_check_branch
      %61 = sbr.rel (0) target = $region25
    $region24: #{tpu_custom_call.1} parent=1 // pred_region
      %62 = dma.done [#allocation6], 128
    $region25: #{tpu_custom_call.1} parent=1 // pred_fallthru
      _
    // Predicated region
    $region26: #{tpu_custom_call.1} parent=1 // pred_check
      _
    $region27: #{tpu_custom_call.1} parent=1 // pred_check_branch
      %64 = sbr.rel (0) target = $region29
    $region28: #{tpu_custom_call.1} parent=1 // pred_region
      %65 = dma.done [#allocation6], 6144
    $region29: #{tpu_custom_call.1} parent=1 // pred_fallthru
      _
    // Predicated region
    $region30: #{tpu_custom_call.1} parent=1 // pred_check
      _
    $region31: #{tpu_custom_call.1} parent=1 // pred_check_branch
      %67 = sbr.rel (0) target = $region33
    $region32: #{tpu_custom_call.1} parent=1 // pred_region
      %68 = dma.done [#allocation9], 96
    $region33: #{tpu_custom_call.1} parent=1 // pred_fallthru
      _
    %v70 = vld [vmem:[#allocation2] sm:$0xff]
    %v71 = vld [vmem:[#allocation2 + $0x8] sm:$0xff]
    %v72 = vld [vmem:[#allocation2 + $0x10] sm:$0xff]
    %v73 = vld [vmem:[#allocation2 + $0x18] sm:$0x1]
    %v74 = vld [vmem:[#allocation5] sm:$0x1]
    %v75 = vlaneseq
    %v76 = vshrl.u32 %v75, 7
    %v77 = vsub.s32 0, %v76
    %v78 = vrot.slane %v74, %v77
    %vm79 = vcmp.ge.f32.partialorder %v70, %v78
    %vm80 = vcmp.ge.f32.partialorder %v71, %v78
    %vm81 = vcmp.ge.f32.partialorder %v72, %v78
    %vm82 = vcmp.ge.f32.partialorder %v73, %v78
    %v83 = vsel %vm79, 1, 0
    %v84 = vsel %vm80, 1, 0
    %v85 = vsel %vm81, 1, 0
    %v86 = vsel %vm82, 1, 0
    %v87 = vcvt.s32.f32 %v83
    %v88 = vcvt.s32.f32 %v84
    %v89 = vcvt.s32.f32 %v85
    %v90 = vcvt.s32.f32 %v86
    %v91 = vadd.f32 %v87, 0.0
    %v92 = vadd.f32 %v88, 0.0
    %v93 = vadd.f32 %v89, 0.0
    %v94 = vadd.f32 %v90, 0.0
    %v95 = vld [vmem:[#allocation5 + $0x1] sm:$0x1]
    %v96 = vlaneseq
    %v97 = vshrl.u32 %v96, 7
    %v98 = vsub.s32 0, %v97
    %v99 = vrot.slane %v95, %v98
    %vm100 = vcmp.ge.f32.partialorder %v70, %v99
    %vm101 = vcmp.ge.f32.partialorder %v71, %v99
    %vm102 = vcmp.ge.f32.partialorder %v72, %v99
    %vm103 = vcmp.ge.f32.partialorder %v73, %v99
    %v104 = vsel %vm100, 1, 0
    %v105 = vsel %vm101, 1, 0
    %v106 = vsel %vm102, 1, 0
    %v107 = vsel %vm103, 1, 0
    %v108 = vcvt.s32.f32 %v104
    %v109 = vcvt.s32.f32 %v105
    %v110 = vcvt.s32.f32 %v106
    %v111 = vcvt.s32.f32 %v107
    %v112 = vadd.f32 %v91, %v108
    %v113 = vadd.f32 %v92, %v109
    %v114 = vadd.f32 %v93, %v110
    %v115 = vadd.f32 %v94, %v111
    %v116 = vld [vmem:[#allocation5 + $0x2] sm:$0x1]
    %v117 = vlaneseq
    %v118 = vshrl.u32 %v117, 7
    %v119 = vsub.s32 0, %v118
    %v120 = vrot.slane %v116, %v119
    %vm121 = vcmp.ge.f32.partialorder %v70, %v120
    %vm122 = vcmp.ge.f32.partialorder %v71, %v120
    %vm123 = vcmp.ge.f32.partialorder %v72, %v120
    %vm124 = vcmp.ge.f32.partialorder %v73, %v120
    %v125 = vsel %vm121, 1, 0
    %v126 = vsel %vm122, 1, 0
    %v127 = vsel %vm123, 1, 0
    %v128 = vsel %vm124, 1, 0
    %v129 = vcvt.s32.f32 %v125
    %v130 = vcvt.s32.f32 %v126
    %v131 = vcvt.s32.f32 %v127
    %v132 = vcvt.s32.f32 %v128
    %v133 = vadd.f32 %v112, %v129
    %v134 = vadd.f32 %v113, %v130
    %v135 = vadd.f32 %v114, %v131
    %v136 = vadd.f32 %v115, %v132
    %v137 = vld [vmem:[#allocation5 + $0x3] sm:$0x1]
    %v138 = vlaneseq
    %v139 = vshrl.u32 %v138, 7
    %v140 = vsub.s32 0, %v139
    %v141 = vrot.slane %v137, %v140
    %vm142 = vcmp.ge.f32.partialorder %v70, %v141
    %vm143 = vcmp.ge.f32.partialorder %v71, %v141
    %vm144 = vcmp.ge.f32.partialorder %v72, %v141
    %vm145 = vcmp.ge.f32.partialorder %v73, %v141
    %v146 = vsel %vm142, 1, 0
    %v147 = vsel %vm143, 1, 0
    %v148 = vsel %vm144, 1, 0
    %v149 = vsel %vm145, 1, 0
    %v150 = vcvt.s32.f32 %v146
    %v151 = vcvt.s32.f32 %v147
    %v152 = vcvt.s32.f32 %v148
    %v153 = vcvt.s32.f32 %v149
    %v154 = vadd.f32 %v133, %v150
    %v155 = vadd.f32 %v134, %v151
    %v156 = vadd.f32 %v135, %v152
    %v157 = vadd.f32 %v136, %v153
    %v158 = vld [vmem:[#allocation5 + $0x4] sm:$0x1]
    %v159 = vlaneseq
    %v160 = vshrl.u32 %v159, 7
    %v161 = vsub.s32 0, %v160
    %v162 = vrot.slane %v158, %v161
    %vm163 = vcmp.ge.f32.partialorder %v70, %v162
    %vm164 = vcmp.ge.f32.partialorder %v71, %v162
    %vm165 = vcmp.ge.f32.partialorder %v72, %v162
    %vm166 = vcmp.ge.f32.partialorder %v73, %v162
    %v167 = vsel %vm163, 1, 0
    %v168 = vsel %vm164, 1, 0
    %v169 = vsel %vm165, 1, 0
    %v170 = vsel %vm166, 1, 0
    %v171 = vcvt.s32.f32 %v167
    %v172 = vcvt.s32.f32 %v168
    %v173 = vcvt.s32.f32 %v169
    %v174 = vcvt.s32.f32 %v170
    %v175 = vadd.f32 %v154, %v171
    %v176 = vadd.f32 %v155, %v172
    %v177 = vadd.f32 %v156, %v173
    %v178 = vadd.f32 %v157, %v174
    %v179 = vld [vmem:[#allocation5 + $0x5] sm:$0x1]
    %v180 = vlaneseq
    %v181 = vshrl.u32 %v180, 7
    %v182 = vsub.s32 0, %v181
    %v183 = vrot.slane %v179, %v182
    %vm184 = vcmp.lt.f32.partialorder %v70, %v183
    %vm185 = vcmp.lt.f32.partialorder %v71, %v183
    %vm186 = vcmp.lt.f32.partialorder %v72, %v183
    %vm187 = vcmp.lt.f32.partialorder %v73, %v183
    %v188 = vsel %vm184, %v175, 0.0
    %v189 = vsel %vm185, %v176, 0.0
    %v190 = vsel %vm186, %v177, 0.0
    %v191 = vsel %vm187, %v178, 0.0
    %v192 = vpack.c.bf16 %v189, %v188
    %v193 = vpack.c.bf16 %v191, %v190
    %v194 = vld [vmem:[#allocation7] sm:$0xff]
    %v195 = vld [vmem:[#allocation7 + $0x8] sm:$0xff]
    %v196 = vld [vmem:[#allocation7 + $0x10] sm:$0xff]
    %v197 = vld [vmem:[#allocation7 + $0x18] sm:$0xff]
    %v198 = vld [vmem:[#allocation7 + $0x20] sm:$0xff]
    %v199 = vld [vmem:[#allocation7 + $0x28] sm:$0xff]
    %v200 = vld [vmem:[#allocation7 + $0x30] sm:$0xff]
    %v201 = vld [vmem:[#allocation7 + $0x38] sm:$0xff]
    %v202 = vld [vmem:[#allocation7 + $0x40] sm:$0xff]
    %v203 = vld [vmem:[#allocation7 + $0x48] sm:$0xff]
    %v204 = vld [vmem:[#allocation7 + $0x50] sm:$0xff]
    %v205 = vld [vmem:[#allocation7 + $0x58] sm:$0xff]
    %v206 = vld [vmem:[#allocation7 + $0x60] sm:$0xff]
    %v207 = vld [vmem:[#allocation7 + $0x68] sm:$0xff]
    %v208 = vld [vmem:[#allocation7 + $0x70] sm:$0xff]
    %v209 = vld [vmem:[#allocation7 + $0x78] sm:$0xff]
    %v210 = vld [vmem:[#allocation7 + $0x80] sm:$0xff]
    %v211 = vld [vmem:[#allocation7 + $0x88] sm:$0xff]
    %v212 = vld [vmem:[#allocation7 + $0x90] sm:$0xff]
    %v213 = vld [vmem:[#allocation7 + $0x98] sm:$0xff]
    %v214 = vld [vmem:[#allocation7 + $0xa0] sm:$0xff]
    %v215 = vld [vmem:[#allocation7 + $0xa8] sm:$0xff]
    %v216 = vld [vmem:[#allocation7 + $0xb0] sm:$0xff]
    %v217 = vld [vmem:[#allocation7 + $0xb8] sm:$0xff]
    %v218 = vld [vmem:[#allocation7 + $0xc0] sm:$0xff]
    %v219 = vld [vmem:[#allocation7 + $0xc8] sm:$0xff]
    %v220 = vld [vmem:[#allocation7 + $0xd0] sm:$0xff]
    %v221 = vld [vmem:[#allocation7 + $0xd8] sm:$0xff]
    %v222 = vld [vmem:[#allocation7 + $0xe0] sm:$0xff]
    %v223 = vld [vmem:[#allocation7 + $0xe8] sm:$0xff]
    %v224 = vld [vmem:[#allocation7 + $0xf0] sm:$0xff]
    %v225 = vld [vmem:[#allocation7 + $0xf8] sm:$0xff]
    %v226 = vld [vmem:[#allocation7 + $0x100] sm:$0xff]
    %v227 = vld [vmem:[#allocation7 + $0x108] sm:$0xff]
    %v228 = vld [vmem:[#allocation7 + $0x110] sm:$0xff]
    %v229 = vld [vmem:[#allocation7 + $0x118] sm:$0xff]
    %v230 = vld [vmem:[#allocation7 + $0x120] sm:$0xff]
    %v231 = vld [vmem:[#allocation7 + $0x128] sm:$0xff]
    %v232 = vld [vmem:[#allocation7 + $0x130] sm:$0xff]
    %v233 = vld [vmem:[#allocation7 + $0x138] sm:$0xff]
    %v234 = vld [vmem:[#allocation7 + $0x140] sm:$0xff]
    %v235 = vld [vmem:[#allocation7 + $0x148] sm:$0xff]
    %v236 = vld [vmem:[#allocation7 + $0x150] sm:$0xff]
    %v237 = vld [vmem:[#allocation7 + $0x158] sm:$0xff]
    %v238 = vld [vmem:[#allocation7 + $0x160] sm:$0xff]
    %v239 = vld [vmem:[#allocation7 + $0x168] sm:$0xff]
    %v240 = vld [vmem:[#allocation7 + $0x170] sm:$0xff]
    %v241 = vld [vmem:[#allocation7 + $0x178] sm:$0xff]
    %v290 = vunpack.c.l.b16 %v194
    %v291 = vunpack.c.h.b16 %v194
    %v292 = vunpack.c.l.b16 %v195
    %v293 = vunpack.c.h.b16 %v195
    %v294 = vunpack.c.l.b16 %v196
    %v295 = vunpack.c.h.b16 %v196
    %v296 = vunpack.c.l.b16 %v197
    %v297 = vunpack.c.h.b16 %v197
    %v298 = vunpack.c.l.b16 %v198
    %v299 = vunpack.c.h.b16 %v198
    %v300 = vunpack.c.l.b16 %v199
    %v301 = vunpack.c.h.b16 %v199
    %v302 = vunpack.c.l.b16 %v200
    %v303 = vunpack.c.h.b16 %v200
    %v304 = vunpack.c.l.b16 %v201
    %v305 = vunpack.c.h.b16 %v201
    %v306 = vunpack.c.l.b16 %v202
    %v307 = vunpack.c.h.b16 %v202
    %v308 = vunpack.c.l.b16 %v203
    %v309 = vunpack.c.h.b16 %v203
    %v310 = vunpack.c.l.b16 %v204
    %v311 = vunpack.c.h.b16 %v204
    %v312 = vunpack.c.l.b16 %v205
    %v313 = vunpack.c.h.b16 %v205
    %v314 = vunpack.c.l.b16 %v206
    %v315 = vunpack.c.h.b16 %v206
    %v316 = vunpack.c.l.b16 %v207
    %v317 = vunpack.c.h.b16 %v207
    %v318 = vunpack.c.l.b16 %v208
    %v319 = vunpack.c.h.b16 %v208
    %v320 = vunpack.c.l.b16 %v209
    %v321 = vunpack.c.h.b16 %v209
    %v322 = vunpack.c.l.b16 %v210
    %v323 = vunpack.c.h.b16 %v210
    %v324 = vunpack.c.l.b16 %v211
    %v325 = vunpack.c.h.b16 %v211
    %v326 = vunpack.c.l.b16 %v212
    %v327 = vunpack.c.h.b16 %v212
    %v328 = vunpack.c.l.b16 %v213
    %v329 = vunpack.c.h.b16 %v213
    %v330 = vunpack.c.l.b16 %v214
    %v331 = vunpack.c.h.b16 %v214
    %v332 = vunpack.c.l.b16 %v215
    %v333 = vunpack.c.h.b16 %v215
    %v334 = vunpack.c.l.b16 %v216
    %v335 = vunpack.c.h.b16 %v216
    %v336 = vunpack.c.l.b16 %v217
    %v337 = vunpack.c.h.b16 %v217
    %v338 = vunpack.c.l.b16 %v218
    %v339 = vunpack.c.h.b16 %v218
    %v340 = vunpack.c.l.b16 %v219
    %v341 = vunpack.c.h.b16 %v219
    %v342 = vunpack.c.l.b16 %v220
    %v343 = vunpack.c.h.b16 %v220
    %v344 = vunpack.c.l.b16 %v221
    %v345 = vunpack.c.h.b16 %v221
    %v346 = vunpack.c.l.b16 %v222
    %v347 = vunpack.c.h.b16 %v222
    %v348 = vunpack.c.l.b16 %v223
    %v349 = vunpack.c.h.b16 %v223
    %v350 = vunpack.c.l.b16 %v224
    %v351 = vunpack.c.h.b16 %v224
    %v352 = vunpack.c.l.b16 %v225
    %v353 = vunpack.c.h.b16 %v225
    %v354 = vunpack.c.l.b16 %v226
    %v355 = vunpack.c.h.b16 %v226
    %v356 = vunpack.c.l.b16 %v227
    %v357 = vunpack.c.h.b16 %v227
    %v358 = vunpack.c.l.b16 %v228
    %v359 = vunpack.c.h.b16 %v228
    %v360 = vunpack.c.l.b16 %v229
    %v361 = vunpack.c.h.b16 %v229
    %v362 = vunpack.c.l.b16 %v230
    %v363 = vunpack.c.h.b16 %v230
    %v364 = vunpack.c.l.b16 %v231
    %v365 = vunpack.c.h.b16 %v231
    %v366 = vunpack.c.l.b16 %v232
    %v367 = vunpack.c.h.b16 %v232
    %v368 = vunpack.c.l.b16 %v233
    %v369 = vunpack.c.h.b16 %v233
    %v370 = vunpack.c.l.b16 %v234
    %v371 = vunpack.c.h.b16 %v234
    %v372 = vunpack.c.l.b16 %v235
    %v373 = vunpack.c.h.b16 %v235
    %v374 = vunpack.c.l.b16 %v236
    %v375 = vunpack.c.h.b16 %v236
    %v376 = vunpack.c.l.b16 %v237
    %v377 = vunpack.c.h.b16 %v237
    %v378 = vunpack.c.l.b16 %v238
    %v379 = vunpack.c.h.b16 %v238
    %v380 = vunpack.c.l.b16 %v239
    %v381 = vunpack.c.h.b16 %v239
    %v382 = vunpack.c.l.b16 %v240
    %v383 = vunpack.c.h.b16 %v240
    %v384 = vunpack.c.l.b16 %v241
    %v385 = vunpack.c.h.b16 %v241
    %v386 = vpack.c.b16 %v296, %v290
    %v387 = vpack.c.b16 %v297, %v291
    %v388 = vpack.c.b16 %v298, %v292
    %v389 = vpack.c.b16 %v299, %v293
    %v390 = vpack.c.b16 %v300, %v294
    %v391 = vpack.c.b16 %v301, %v295
    %v392 = vpack.c.b16 %v308, %v302
    %v393 = vpack.c.b16 %v309, %v303
    %v394 = vpack.c.b16 %v310, %v304
    %v395 = vpack.c.b16 %v311, %v305
    %v396 = vpack.c.b16 %v312, %v306
    %v397 = vpack.c.b16 %v313, %v307
    %v398 = vpack.c.b16 %v320, %v314
    %v399 = vpack.c.b16 %v321, %v315
    %v400 = vpack.c.b16 %v322, %v316
    %v401 = vpack.c.b16 %v323, %v317
    %v402 = vpack.c.b16 %v324, %v318
    %v403 = vpack.c.b16 %v325, %v319
    %v404 = vpack.c.b16 %v332, %v326
    %v405 = vpack.c.b16 %v333, %v327
    %v406 = vpack.c.b16 %v334, %v328
    %v407 = vpack.c.b16 %v335, %v329
    %v408 = vpack.c.b16 %v336, %v330
    %v409 = vpack.c.b16 %v337, %v331
    %v410 = vpack.c.b16 %v344, %v338
    %v411 = vpack.c.b16 %v345, %v339
    %v412 = vpack.c.b16 %v346, %v340
    %v413 = vpack.c.b16 %v347, %v341
    %v414 = vpack.c.b16 %v348, %v342
    %v415 = vpack.c.b16 %v349, %v343
    %v416 = vpack.c.b16 %v356, %v350
    %v417 = vpack.c.b16 %v357, %v351
    %v418 = vpack.c.b16 %v358, %v352
    %v419 = vpack.c.b16 %v359, %v353
    %v420 = vpack.c.b16 %v360, %v354
    %v421 = vpack.c.b16 %v361, %v355
    %v422 = vpack.c.b16 %v368, %v362
    %v423 = vpack.c.b16 %v369, %v363
    %v424 = vpack.c.b16 %v370, %v364
    %v425 = vpack.c.b16 %v371, %v365
    %v426 = vpack.c.b16 %v372, %v366
    %v427 = vpack.c.b16 %v373, %v367
    %v428 = vpack.c.b16 %v380, %v374
    %v429 = vpack.c.b16 %v381, %v375
    %v430 = vpack.c.b16 %v382, %v376
    %v431 = vpack.c.b16 %v383, %v377
    %v432 = vpack.c.b16 %v384, %v378
    %v433 = vpack.c.b16 %v385, %v379
    %482 = vmatprep.subr.bf16.mxu0 %v429
    %483 = vmatpush1.bf16.msra.mxu0 %v428
    %484 = vmatprep.subr.bf16.mxu0 %v423
    %485 = vmatpush1.bf16.msra.mxu0 %v422
    %486 = vmatprep.subr.bf16.mxu0 %v417
    %487 = vmatpush1.bf16.msra.mxu0 %v416
    %488 = vmatprep.subr.bf16.mxu0 %v411
    %489 = vmatpush1.bf16.msra.mxu0 %v410
    %490 = vmatprep.subr.bf16.mxu0 %v405
    %491 = vmatpush1.bf16.msra.mxu0 %v404
    %492 = vmatprep.subr.bf16.mxu0 %v399
    %493 = vmatpush1.bf16.msra.mxu0 %v398
    %494 = vmatprep.subr.bf16.mxu0 %v393
    %495 = vmatpush1.bf16.msra.mxu0 %v392
    %496 = vmatprep.subr.bf16.mxu0 %v387
    %497 = vmatpush1.bf16.msra.mxu0 %v386
    %498 = vmatprep.subr.bf16.mxu0 0
    %499 = vmatpush2.bf16.msra.mxu0 0
    %500 = vmatprep.subr.bf16.mxu0 0
    %501 = vmatpush2.bf16.msra.mxu0 0
    %502 = vmatprep.subr.bf16.mxu0 0
    %503 = vmatpush2.bf16.msra.mxu0 0
    %504 = vmatprep.subr.bf16.mxu0 0
    %505 = vmatpush2.bf16.msra.mxu0 0
    %506 = vmatprep.subr.bf16.mxu0 0
    %507 = vmatpush2.bf16.msra.mxu0 0
    %508 = vmatprep.subr.bf16.mxu0 0
    %509 = vmatpush2.bf16.msra.mxu0 0
    %510 = vmatprep.subr.bf16.mxu0 0
    %511 = vmatpush2.bf16.msra.mxu0 0
    %512 = vmatprep.subr.bf16.mxu0 0
    %513 = vmatpush2.bf16.msra.mxu0 0
    %514 = vmatprep.mubr.bf16.mxu0 0
    %515 = vmatmul.mubr.bf16.gmra.mxu0 %v192
    %v516 = vpop.f32.mrf.mxu0
    %v517 = vadd.f32 0.0, %v516
    %v518 = vpop.f32.mrf.mxu0
    %v519 = vadd.f32 0.0, %v518
    %v520 = vpop.f32.mrf.mxu0
    %v521 = vadd.f32 0.0, %v520
    %v522 = vpop.f32.mrf.mxu0
    %v523 = vadd.f32 0.0, %v522
    %524 = vmatprep.mubr.bf16.mxu0 0
    %525 = vmatmul.mubr.bf16.gmra.mxu0 %v193
    %v526 = vpop.f32.mrf.mxu0
    %v527 = vadd.f32 0.0, %v526
    %v528 = vpop.f32.mrf.mxu0
    %v529 = vadd.f32 0.0, %v528
    %v530 = vpop.f32.mrf.mxu0
    %v531 = vadd.f32 0.0, %v530
    %v532 = vpop.f32.mrf.mxu0
    %v533 = vadd.f32 0.0, %v532
    %534 = vdwg.mxu0
    %535 = vmatprep.subr.bf16.mxu0 %v431
    %536 = vmatpush1.bf16.msra.mxu0 %v430
    %537 = vmatprep.subr.bf16.mxu0 %v425
    %538 = vmatpush1.bf16.msra.mxu0 %v424
    %539 = vmatprep.subr.bf16.mxu0 %v419
    %540 = vmatpush1.bf16.msra.mxu0 %v418
    %541 = vmatprep.subr.bf16.mxu0 %v413
    %542 = vmatpush1.bf16.msra.mxu0 %v412
    %543 = vmatprep.subr.bf16.mxu0 %v407
    %544 = vmatpush1.bf16.msra.mxu0 %v406
    %545 = vmatprep.subr.bf16.mxu0 %v401
    %546 = vmatpush1.bf16.msra.mxu0 %v400
    %547 = vmatprep.subr.bf16.mxu0 %v395
    %548 = vmatpush1.bf16.msra.mxu0 %v394
    %549 = vmatprep.subr.bf16.mxu0 %v389
    %550 = vmatpush1.bf16.msra.mxu0 %v388
    %551 = vmatprep.subr.bf16.mxu0 0
    %552 = vmatpush2.bf16.msra.mxu0 0
    %553 = vmatprep.subr.bf16.mxu0 0
    %554 = vmatpush2.bf16.msra.mxu0 0
    %555 = vmatprep.subr.bf16.mxu0 0
    %556 = vmatpush2.bf16.msra.mxu0 0
    %557 = vmatprep.subr.bf16.mxu0 0
    %558 = vmatpush2.bf16.msra.mxu0 0
    %559 = vmatprep.subr.bf16.mxu0 0
    %560 = vmatpush2.bf16.msra.mxu0 0
    %561 = vmatprep.subr.bf16.mxu0 0
    %562 = vmatpush2.bf16.msra.mxu0 0
    %563 = vmatprep.subr.bf16.mxu0 0
    %564 = vmatpush2.bf16.msra.mxu0 0
    %565 = vmatprep.subr.bf16.mxu0 0
    %566 = vmatpush2.bf16.msra.mxu0 0
    %567 = vmatprep.mubr.bf16.mxu0 0
    %568 = vmatmul.mubr.bf16.gmra.mxu0 %v192
    %v569 = vpop.f32.mrf.mxu0
    %v570 = vadd.f32 0.0, %v569
    %v571 = vpop.f32.mrf.mxu0
    %v572 = vadd.f32 0.0, %v571
    %v573 = vpop.f32.mrf.mxu0
    %v574 = vadd.f32 0.0, %v573
    %v575 = vpop.f32.mrf.mxu0
    %v576 = vadd.f32 0.0, %v575
    %577 = vmatprep.mubr.bf16.mxu0 0
    %578 = vmatmul.mubr.bf16.gmra.mxu0 %v193
    %v579 = vpop.f32.mrf.mxu0
    %v580 = vadd.f32 0.0, %v579
    %v581 = vpop.f32.mrf.mxu0
    %v582 = vadd.f32 0.0, %v581
    %v583 = vpop.f32.mrf.mxu0
    %v584 = vadd.f32 0.0, %v583
    %v585 = vpop.f32.mrf.mxu0
    %v586 = vadd.f32 0.0, %v585
    %587 = vdwg.mxu0
    %588 = vmatprep.subr.bf16.mxu0 %v433
    %589 = vmatpush1.bf16.msra.mxu0 %v432
    %590 = vmatprep.subr.bf16.mxu0 %v427
    %591 = vmatpush1.bf16.msra.mxu0 %v426
    %592 = vmatprep.subr.bf16.mxu0 %v421
    %593 = vmatpush1.bf16.msra.mxu0 %v420
    %594 = vmatprep.subr.bf16.mxu0 %v415
    %595 = vmatpush1.bf16.msra.mxu0 %v414
    %596 = vmatprep.subr.bf16.mxu0 %v409
    %597 = vmatpush1.bf16.msra.mxu0 %v408
    %598 = vmatprep.subr.bf16.mxu0 %v403
    %599 = vmatpush1.bf16.msra.mxu0 %v402
    %600 = vmatprep.subr.bf16.mxu0 %v397
    %601 = vmatpush1.bf16.msra.mxu0 %v396
    %602 = vmatprep.subr.bf16.mxu0 %v391
    %603 = vmatpush1.bf16.msra.mxu0 %v390
    %604 = vmatprep.subr.bf16.mxu0 0
    %605 = vmatpush2.bf16.msra.mxu0 0
    %606 = vmatprep.subr.bf16.mxu0 0
    %607 = vmatpush2.bf16.msra.mxu0 0
    %608 = vmatprep.subr.bf16.mxu0 0
    %609 = vmatpush2.bf16.msra.mxu0 0
    %610 = vmatprep.subr.bf16.mxu0 0
    %611 = vmatpush2.bf16.msra.mxu0 0
    %612 = vmatprep.subr.bf16.mxu0 0
    %613 = vmatpush2.bf16.msra.mxu0 0
    %614 = vmatprep.subr.bf16.mxu0 0
    %615 = vmatpush2.bf16.msra.mxu0 0
    %616 = vmatprep.subr.bf16.mxu0 0
    %617 = vmatpush2.bf16.msra.mxu0 0
    %618 = vmatprep.subr.bf16.mxu0 0
    %619 = vmatpush2.bf16.msra.mxu0 0
    %620 = vmatprep.mubr.bf16.mxu0 0
    %621 = vmatmul.mubr.bf16.gmra.mxu0 %v192
    %v622 = vpop.f32.mrf.mxu0
    %v623 = vadd.f32 0.0, %v622
    %v624 = vpop.f32.mrf.mxu0
    %v625 = vadd.f32 0.0, %v624
    %v626 = vpop.f32.mrf.mxu0
    %v627 = vadd.f32 0.0, %v626
    %v628 = vpop.f32.mrf.mxu0
    %v629 = vadd.f32 0.0, %v628
    %630 = vmatprep.mubr.bf16.mxu0 0
    %631 = vmatmul.mubr.bf16.gmra.mxu0 %v193
    %v632 = vpop.f32.mrf.mxu0
    %v633 = vadd.f32 0.0, %v632
    %v634 = vpop.f32.mrf.mxu0
    %v635 = vadd.f32 0.0, %v634
    %v636 = vpop.f32.mrf.mxu0
    %v637 = vadd.f32 0.0, %v636
    %v638 = vpop.f32.mrf.mxu0
    %v639 = vadd.f32 0.0, %v638
    %640 = vdwg.mxu0
    %v641 = vld [vmem:[#allocation8] sm:$0x3f]
    %v643 = vlaneseq
    %v644 = vshrl.u32 %v643, 7
    %v645 = vsub.s32 0, %v644
    %v646 = vrot.slane %v641, %v645
    %v647 = vlaneseq
    %v648 = vshrl.u32 %v647, 7
    %v649 = vsub.s32 1, %v648
    %v650 = vrot.slane %v641, %v649
    %v651 = vlaneseq
    %v652 = vshrl.u32 %v651, 7
    %v653 = vsub.s32 2, %v652
    %v654 = vrot.slane %v641, %v653
    %v655 = vlaneseq
    %v656 = vshrl.u32 %v655, 7
    %v657 = vsub.s32 3, %v656
    %v658 = vrot.slane %v641, %v657
    %v659 = vlaneseq
    %v660 = vshrl.u32 %v659, 7
    %v661 = vsub.s32 4, %v660
    %v662 = vrot.slane %v641, %v661
    %v663 = vlaneseq
    %v664 = vshrl.u32 %v663, 7
    %v665 = vsub.s32 5, %v664
    %v666 = vrot.slane %v641, %v665
    %vm673 = vcmp.eq.f32.partialorder %v517, %v646
    %vm674 = vcmp.eq.f32.partialorder %v519, %v650
    %vm675 = vcmp.eq.f32.partialorder %v570, %v654
    %vm676 = vcmp.eq.f32.partialorder %v572, %v658
    %vm677 = vcmp.eq.f32.partialorder %v623, %v662
    %vm678 = vcmp.eq.f32.partialorder %v625, %v666
    %vm679 = vcmp.eq.f32.partialorder %v521, %v646
    %vm680 = vcmp.eq.f32.partialorder %v523, %v650
    %vm681 = vcmp.eq.f32.partialorder %v574, %v654
    %vm682 = vcmp.eq.f32.partialorder %v576, %v658
    %vm683 = vcmp.eq.f32.partialorder %v627, %v662
    %vm684 = vcmp.eq.f32.partialorder %v629, %v666
    %vm685 = vcmp.eq.f32.partialorder %v527, %v646
    %vm686 = vcmp.eq.f32.partialorder %v529, %v650
    %vm687 = vcmp.eq.f32.partialorder %v580, %v654
    %vm688 = vcmp.eq.f32.partialorder %v582, %v658
    %vm689 = vcmp.eq.f32.partialorder %v633, %v662
    %vm690 = vcmp.eq.f32.partialorder %v635, %v666
    %vm691 = vcmp.eq.f32.partialorder %v531, %v646
    %vm692 = vcmp.eq.f32.partialorder %v533, %v650
    %vm693 = vcmp.eq.f32.partialorder %v584, %v654
    %vm694 = vcmp.eq.f32.partialorder %v586, %v658
    %vm695 = vcmp.eq.f32.partialorder %v637, %v662
    %vm696 = vcmp.eq.f32.partialorder %v639, %v666
    %v697 = vsel %vm673, 1, 0
    %v698 = vsel %vm674, 1, 0
    %v699 = vsel %vm675, 1, 0
    %v700 = vsel %vm676, 1, 0
    %v701 = vsel %vm677, 1, 0
    %v702 = vsel %vm678, 1, 0
    %v703 = vsel %vm679, 1, 0
    %v704 = vsel %vm680, 1, 0
    %v705 = vsel %vm681, 1, 0
    %v706 = vsel %vm682, 1, 0
    %v707 = vsel %vm683, 1, 0
    %v708 = vsel %vm684, 1, 0
    %v709 = vsel %vm685, 1, 0
    %v710 = vsel %vm686, 1, 0
    %v711 = vsel %vm687, 1, 0
    %v712 = vsel %vm688, 1, 0
    %v713 = vsel %vm689, 1, 0
    %v714 = vsel %vm690, 1, 0
    %v715 = vsel %vm691, 1, 0
    %v716 = vsel %vm692, 1, 0
    %v717 = vsel %vm693, 1, 0
    %v718 = vsel %vm694, 1, 0
    %v719 = vsel %vm695, 1, 0
    %v720 = vsel %vm696, 1, 0
    %v721 = vcvt.s32.f32 %v697
    %v722 = vcvt.s32.f32 %v698
    %v723 = vcvt.s32.f32 %v699
    %v724 = vcvt.s32.f32 %v700
    %v725 = vcvt.s32.f32 %v701
    %v726 = vcvt.s32.f32 %v702
    %v727 = vcvt.s32.f32 %v703
    %v728 = vcvt.s32.f32 %v704
    %v729 = vcvt.s32.f32 %v705
    %v730 = vcvt.s32.f32 %v706
    %v731 = vcvt.s32.f32 %v707
    %v732 = vcvt.s32.f32 %v708
    %v733 = vcvt.s32.f32 %v709
    %v734 = vcvt.s32.f32 %v710
    %v735 = vcvt.s32.f32 %v711
    %v736 = vcvt.s32.f32 %v712
    %v737 = vcvt.s32.f32 %v713
    %v738 = vcvt.s32.f32 %v714
    %v739 = vcvt.s32.f32 %v715
    %v740 = vcvt.s32.f32 %v716
    %v741 = vcvt.s32.f32 %v717
    %v742 = vcvt.s32.f32 %v718
    %v743 = vcvt.s32.f32 %v719
    %v744 = vcvt.s32.f32 %v720
    %745 = vst [vmem:[#allocation10] sm:$0xff] %v721
    %746 = vst [vmem:[#allocation10 + $0x8] sm:$0xff] %v722
    %747 = vst [vmem:[#allocation10 + $0x10] sm:$0xff] %v723
    %748 = vst [vmem:[#allocation10 + $0x18] sm:$0xff] %v724
    %749 = vst [vmem:[#allocation10 + $0x20] sm:$0xff] %v725
    %750 = vst [vmem:[#allocation10 + $0x28] sm:$0xff] %v726
    %751 = vst [vmem:[#allocation10 + $0x30] sm:$0xff] %v727
    %752 = vst [vmem:[#allocation10 + $0x38] sm:$0xff] %v728
    %753 = vst [vmem:[#allocation10 + $0x40] sm:$0xff] %v729
    %754 = vst [vmem:[#allocation10 + $0x48] sm:$0xff] %v730
    %755 = vst [vmem:[#allocation10 + $0x50] sm:$0xff] %v731
    %756 = vst [vmem:[#allocation10 + $0x58] sm:$0xff] %v732
    %757 = vst [vmem:[#allocation10 + $0x60] sm:$0xff] %v733
    %758 = vst [vmem:[#allocation10 + $0x68] sm:$0xff] %v734
    %759 = vst [vmem:[#allocation10 + $0x70] sm:$0xff] %v735
    %760 = vst [vmem:[#allocation10 + $0x78] sm:$0xff] %v736
    %761 = vst [vmem:[#allocation10 + $0x80] sm:$0xff] %v737
    %762 = vst [vmem:[#allocation10 + $0x88] sm:$0xff] %v738
    %763 = vst [vmem:[#allocation10 + $0x90] sm:$0x1] %v739
    %764 = vst [vmem:[#allocation10 + $0x98] sm:$0x1] %v740
    %765 = vst [vmem:[#allocation10 + $0xa0] sm:$0x1] %v741
    %766 = vst [vmem:[#allocation10 + $0xa8] sm:$0x1] %v742
    %767 = vst [vmem:[#allocation10 + $0xb0] sm:$0x1] %v743
    %768 = vst [vmem:[#allocation10 + $0xb8] sm:$0x1] %v744
    // Predicated region
    $region34: #{tpu_custom_call.1} parent=1 // pred_check
      _
    $region35: #{tpu_custom_call.1} parent=1 // pred_check_branch
      %770 = sbr.rel (0) target = $region37
    $region36: #{tpu_custom_call.1} parent=1 // pred_region
      %s772 = ssub.s32 3072, 3072
      %773 = vsyncadd [#allocation4], %s772
      %s774 = sshll.u32 [#allocation10], 4
      %s775 = int_to_ptr.vmem [resolvable:$true] %s774
      %780 = dma.vmem_to_hbm [thread:$0]  %s775, 3072, %s4, [#allocation4], 768, 768, 48
    $region37: #{tpu_custom_call.1} parent=1 // pred_fallthru
      _
    // Predicated region
    $region38: #{tpu_custom_call.1} parent=1 // pred_check
      _
    $region39: #{tpu_custom_call.1} parent=1 // pred_check_branch
      %782 = sbr.rel (0) target = $region41
    $region40: #{tpu_custom_call.1} parent=1 // pred_region
      %783 = dma.done [#allocation4], 3072
    $region41: #{tpu_custom_call.1} parent=1 // pred_fallthru
      _
    %784 = vsyncpa [#allocation3], 1
    %785 = vsyncpa [#allocation6], 1
    %786 = vsyncpa [#allocation9], 1
    %787 = vsyncpa [#allocation4], 1

</llo_original>
